<compile_context>
chip_gen: v7x
topology: tpu7x:2x2x1
jax: 0.10.0
libtpu: 0.0.40
codegen_flags: <defaults>
</compile_context>

<pallas_src>
import jax
import jax.numpy as jnp
from jax.experimental import pallas as pl
from jax.experimental.pallas import tpu as pltpu

IN_DIM = 8       # state features
OUT_DIM = 3      # actions
PAD = 128        # lane padding for hidden dims / logits

# Row layout of the packed weight slab (all row offsets multiples of 8).
W1_OFF = 0                    # rows [0, 8)    : W1 padded to (8, 128)
W2_OFF = W1_OFF + IN_DIM      # rows [8, 136)  : W2 padded to (128, 128)
W3_OFF = W2_OFF + PAD         # rows [136, 264): W3 padded to (128, 128)
W4_OFF = W3_OFF + PAD         # rows [264, 392): W4 padded to (128, 128)
B_OFF = W4_OFF + PAD          # rows [392, 400): b1..b4 (one row each), rest 0
SLAB_ROWS = B_OFF + 8         # 400 rows x 128 lanes x 4B = 200 KiB


def dqn_mlp_kernel(x_ref, slab_ref, out_ref):
    x = x_ref[...]                                   # (bm, 8) f32

    w1 = slab_ref[W1_OFF:W1_OFF + IN_DIM, :]         # (8,   128)
    w2 = slab_ref[W2_OFF:W2_OFF + PAD, :]            # (128, 128)
    w3 = slab_ref[W3_OFF:W3_OFF + PAD, :]            # (128, 128)
    w4 = slab_ref[W4_OFF:W4_OFF + PAD, :]            # (128, 128)
    biases = slab_ref[B_OFF:B_OFF + 8, :]            # (8, 128): rows 0..3 = b1..b4
    b1 = biases[0:1, :]
    b2 = biases[1:2, :]
    b3 = biases[2:3, :]
    b4 = biases[3:4, :]

    # 4-layer MLP; zero-padded weight rows/cols keep padded lanes exactly 0.
    h = jnp.maximum(jnp.dot(x, w1, preferred_element_type=jnp.float32) + b1, 0.0)
    h = jnp.maximum(jnp.dot(h, w2, preferred_element_type=jnp.float32) + b2, 0.0)
    h = jnp.maximum(jnp.dot(h, w3, preferred_element_type=jnp.float32) + b3, 0.0)
    logits = jnp.dot(h, w4, preferred_element_type=jnp.float32) + b4   # (bm, 128)

    # Softmax over the 3 real action lanes; padded lanes masked to -inf-ish
    # so they contribute 0 to the sum and store 0 (lane-dense unmasked vst).
    lane = jax.lax.broadcasted_iota(jnp.int32, logits.shape, 1)
    logits = jnp.where(lane < OUT_DIM, logits, jnp.float32(-1e30))
    m = jnp.max(logits, axis=-1, keepdims=True)
    e = jnp.exp(logits - m)
    denom = jnp.sum(e, axis=-1, keepdims=True)
    out_ref[...] = e * pl.reciprocal(denom, approx=True)


def dqn_forward(x, slab, *, block_b=128):
    """x: (B, 8) f32, slab: packed params. Returns (B, 3) action probabilities."""
    B = x.shape[0]
    bm = B if B <= block_b else block_b
    assert B % bm == 0, "batch must be a multiple of the batch block"
    out_padded = pl.pallas_call(
        dqn_mlp_kernel,
        out_shape=jax.ShapeDtypeStruct((B, PAD), jnp.float32),
        grid=(B // bm,),
        in_specs=[
            pl.BlockSpec((bm, IN_DIM), lambda i: (i, 0)),      # batch tile of states
            pl.BlockSpec((SLAB_ROWS, PAD), lambda i: (0, 0)),  # weights: VMEM resident
        ],
        out_specs=pl.BlockSpec((bm, PAD), lambda i: (i, 0)),   # lane-dense output
        compiler_params=pltpu.CompilerParams(
            dimension_semantics=("parallel",)),                # v7x dual-TC batch split
    )(x, slab)
    return out_padded[:, :OUT_DIM]


def init_params(key, first_layer=32, second_layer=64, third_layer=32):
    """Synthetic init mirroring nn.Linear's uniform(-1/sqrt(fan_in), +1/sqrt(fan_in))."""
    dims = [(IN_DIM, first_layer), (first_layer, second_layer),
            (second_layer, third_layer), (third_layer, OUT_DIM)]
    params = {}
    keys = jax.random.split(key, 2 * len(dims))
    for i, (fan_in, fan_out) in enumerate(dims):
        assert fan_in <= PAD and fan_out <= PAD
        bound = fan_in ** -0.5
        params[f"w{i + 1}"] = jax.random.uniform(
            keys[2 * i], (fan_in, fan_out), minval=-bound, maxval=bound,
            dtype=jnp.float32)
        params[f"b{i + 1}"] = jax.random.uniform(
            keys[2 * i + 1], (fan_out,), minval=-bound, maxval=bound,
            dtype=jnp.float32)
    return params


def pack_params(params):
    """Pack weights/biases into one zero-padded (SLAB_ROWS, 128) f32 slab."""
    slab = jnp.zeros((SLAB_ROWS, PAD), jnp.float32)
    for i, off in enumerate((W1_OFF, W2_OFF, W3_OFF, W4_OFF)):
        w = params[f"w{i + 1}"]
        b = params[f"b{i + 1}"]
        fi, fo = w.shape
        slab = slab.at[off:off + fi, :fo].set(w)
        slab = slab.at[B_OFF + i, :fo].set(b)
    return slab


def reference_forward(x, params):
    """Pure-JAX reference of the PyTorch forward."""
    h = jax.nn.relu(x @ params["w1"] + params["b1"])
    h = jax.nn.relu(h @ params["w2"] + params["b2"])
    h = jax.nn.relu(h @ params["w3"] + params["b3"])
    return jax.nn.softmax(h @ params["w4"] + params["b4"], axis=-1)


# TODO(synk): replay_new / train_short_memory (optimizer, MSE loss, backward) and
# the env helpers (get_state/set_reward/remember) are training/host logic with no
# Pallas forward-kernel equivalent; only forward() is implemented here.

if __name__ == "__main__":
    key = jax.random.PRNGKey(0)
    k_params, k_x = jax.random.split(key)

    # Hidden sizes as in the reference params dict (first/second/third layer).
    params = init_params(k_params, first_layer=32, second_layer=64, third_layer=32)
    slab = pack_params(params)

    # Batch of 128 states of 8 features each (amortizes the weight DMA; still one
    # MXU pass per layer).
    batch = 128
    x = jax.random.normal(k_x, (batch, IN_DIM), dtype=jnp.float32)

    out = dqn_forward(x, slab)
    out = jax.block_until_ready(out)

    assert out.shape == (batch, OUT_DIM)
    ref = reference_forward(x, params)
    assert jnp.allclose(out, ref, atol=5e-3), "kernel does not match JAX reference"
    row_sums = jnp.sum(out, axis=-1)
    # approx=True reciprocal -> rows sum to 1 only to ~1e-3
    assert jnp.allclose(row_sums, jnp.ones_like(row_sums), atol=5e-3)

    print("KERNEL_OK")
</pallas_src>

<mosaic_0001>
module attributes {stable_mosaic.version = 11 : i64} {
  func.func @dqn_mlp_kernel(%arg0: i32, %arg1: memref<128x8xf32, #tpu.memory_space<vmem>>, %arg2: memref<400x128xf32, #tpu.memory_space<vmem>>, %arg3: memref<128x128xf32, #tpu.memory_space<vmem>>) attributes {dimension_semantics = [#tpu.dimension_semantics<parallel>], iteration_bounds = array<i64: 1>, scalar_prefetch = 0 : i64, scratch_operands = 0 : i64, tpu.core_type = #tpu.core_type<tc>, window_params = [{transform_indices = @transform_0, window_bounds = array<i64: 128, 8>}, {pipeline_mode = #tpu.pipeline_mode<synchronous>, transform_indices = @transform_1, window_bounds = array<i64: 400, 128>}, {transform_indices = @transform_2, window_bounds = array<i64: 128, 128>}]} {
    %c0 = arith.constant 0 : index
    %c0_0 = arith.constant 0 : index
    %0 = vector.load %arg1[%c0, %c0_0] : memref<128x8xf32, #tpu.memory_space<vmem>>, vector<128x8xf32>
    %c0_1 = arith.constant 0 : index
    %c0_2 = arith.constant 0 : index
    %1 = vector.load %arg2[%c0_1, %c0_2] : memref<400x128xf32, #tpu.memory_space<vmem>>, vector<8x128xf32>
    %c8 = arith.constant 8 : index
    %c0_3 = arith.constant 0 : index
    %2 = vector.load %arg2[%c8, %c0_3] : memref<400x128xf32, #tpu.memory_space<vmem>>, vector<128x128xf32>
    %c136 = arith.constant 136 : index
    %c0_4 = arith.constant 0 : index
    %3 = vector.load %arg2[%c136, %c0_4] : memref<400x128xf32, #tpu.memory_space<vmem>>, vector<128x128xf32>
    %c264 = arith.constant 264 : index
    %c0_5 = arith.constant 0 : index
    %4 = vector.load %arg2[%c264, %c0_5] : memref<400x128xf32, #tpu.memory_space<vmem>>, vector<128x128xf32>
    %c392 = arith.constant 392 : index
    %c0_6 = arith.constant 0 : index
    %5 = vector.load %arg2[%c392, %c0_6] : memref<400x128xf32, #tpu.memory_space<vmem>>, vector<8x128xf32>
    %6 = vector.extract_strided_slice %5 {offsets = [0, 0], sizes = [1, 128], strides = [1, 1]} : vector<8x128xf32> to vector<1x128xf32>
    %7 = vector.extract_strided_slice %5 {offsets = [1, 0], sizes = [1, 128], strides = [1, 1]} : vector<8x128xf32> to vector<1x128xf32>
    %8 = vector.extract_strided_slice %5 {offsets = [2, 0], sizes = [1, 128], strides = [1, 1]} : vector<8x128xf32> to vector<1x128xf32>
    %9 = vector.extract_strided_slice %5 {offsets = [3, 0], sizes = [1, 128], strides = [1, 1]} : vector<8x128xf32> to vector<1x128xf32>
    %cst = arith.constant dense<0.000000e+00> : vector<128x128xf32>
    %10 = tpu.matmul %0, %1, %cst {dimension_numbers = #tpu.dot_dimension_numbers<[1], [0], [0], [1], [0, 0, 1, 1], [], []>} : vector<128x8xf32>, vector<8x128xf32>, vector<128x128xf32> -> vector<128x128xf32>
    %11 = vector.broadcast %6 : vector<1x128xf32> to vector<128x128xf32>
    %12 = arith.addf %10, %11 : vector<128x128xf32>
    %cst_7 = arith.constant 0.000000e+00 : f32
    %13 = vector.broadcast %cst_7 : f32 to vector<128x128xf32>
    %14 = arith.maximumf %12, %13 : vector<128x128xf32>
    %cst_8 = arith.constant dense<0.000000e+00> : vector<128x128xf32>
    %15 = tpu.matmul %14, %2, %cst_8 {dimension_numbers = #tpu.dot_dimension_numbers<[1], [0], [0], [1], [0, 0, 1, 1], [], []>} : vector<128x128xf32>, vector<128x128xf32>, vector<128x128xf32> -> vector<128x128xf32>
    %16 = vector.broadcast %7 : vector<1x128xf32> to vector<128x128xf32>
    %17 = arith.addf %15, %16 : vector<128x128xf32>
    %cst_9 = arith.constant 0.000000e+00 : f32
    %18 = vector.broadcast %cst_9 : f32 to vector<128x128xf32>
    %19 = arith.maximumf %17, %18 : vector<128x128xf32>
    %cst_10 = arith.constant dense<0.000000e+00> : vector<128x128xf32>
    %20 = tpu.matmul %19, %3, %cst_10 {dimension_numbers = #tpu.dot_dimension_numbers<[1], [0], [0], [1], [0, 0, 1, 1], [], []>} : vector<128x128xf32>, vector<128x128xf32>, vector<128x128xf32> -> vector<128x128xf32>
    %21 = vector.broadcast %8 : vector<1x128xf32> to vector<128x128xf32>
    %22 = arith.addf %20, %21 : vector<128x128xf32>
    %cst_11 = arith.constant 0.000000e+00 : f32
    %23 = vector.broadcast %cst_11 : f32 to vector<128x128xf32>
    %24 = arith.maximumf %22, %23 : vector<128x128xf32>
    %cst_12 = arith.constant dense<0.000000e+00> : vector<128x128xf32>
    %25 = tpu.matmul %24, %4, %cst_12 {dimension_numbers = #tpu.dot_dimension_numbers<[1], [0], [0], [1], [0, 0, 1, 1], [], []>} : vector<128x128xf32>, vector<128x128xf32>, vector<128x128xf32> -> vector<128x128xf32>
    %26 = vector.broadcast %9 : vector<1x128xf32> to vector<128x128xf32>
    %27 = arith.addf %25, %26 : vector<128x128xf32>
    %28 = tpu.iota {dimensions = array<i32: 1>} : vector<128x128xi32>
    %c3_i32 = arith.constant 3 : i32
    %29 = vector.broadcast %c3_i32 : i32 to vector<128x128xi32>
    %30 = arith.cmpi slt, %28, %29 : vector<128x128xi32>
    %cst_13 = arith.constant -1.000000e+30 : f32
    %31 = vector.broadcast %cst_13 : f32 to vector<128x128xf32>
    %32 = arith.select %30, %27, %31 : vector<128x128xi1>, vector<128x128xf32>
    %cst_14 = arith.constant dense<0xFF800000> : vector<128xf32>
    %33 = vector.multi_reduction <maximumf>, %32, %cst_14 [1] : vector<128x128xf32> to vector<128xf32>
    %34 = vector.shape_cast %33 : vector<128xf32> to vector<128x1xf32>
    %35 = vector.broadcast %34 : vector<128x1xf32> to vector<128x128xf32>
    %36 = arith.subf %32, %35 : vector<128x128xf32>
    %37 = math.exp %36 : vector<128x128xf32>
    %cst_15 = arith.constant dense<0.000000e+00> : vector<128xf32>
    %38 = vector.multi_reduction <add>, %37, %cst_15 [1] : vector<128x128xf32> to vector<128xf32>
    %39 = vector.shape_cast %38 : vector<128xf32> to vector<128x1xf32>
    %40 = tpu.reciprocal %39 {approx = true} : vector<128x1xf32> -> vector<128x1xf32>
    %41 = vector.broadcast %40 : vector<128x1xf32> to vector<128x128xf32>
    %42 = arith.mulf %37, %41 : vector<128x128xf32>
    %c0_16 = arith.constant 0 : index
    %c0_17 = arith.constant 0 : index
    %43 = vector.load %arg3[%c0_16, %c0_17] : memref<128x128xf32, #tpu.memory_space<vmem>>, vector<128x128xf32>
    tpu.vector_store %arg3[%c0_16, %c0_17], %42 {strides = array<i32>} : memref<128x128xf32, #tpu.memory_space<vmem>>, vector<128x128xf32>,
    return
  }
  func.func @transform_0(%arg0: i32) -> (i32, i32) {
    %c0_i32 = arith.constant 0 : i32
    %c0_i32_0 = arith.constant 0 : i32
    return %arg0, %c0_i32 : i32, i32
  }
  func.func @transform_1(%arg0: i32) -> (i32, i32) {
    %c0_i32 = arith.constant 0 : i32
    %c0_i32_0 = arith.constant 0 : i32
    %c0_i32_1 = arith.constant 0 : i32
    return %c0_i32, %c0_i32_0 : i32, i32
  }
  func.func @transform_2(%arg0: i32) -> (i32, i32) {
    %c0_i32 = arith.constant 0 : i32
    %c0_i32_0 = arith.constant 0 : i32
    return %arg0, %c0_i32 : i32, i32
  }
}

</mosaic_0001>

<llo_original>
// kernel: tpu_custom_call.1
$region0: #{tpu_custom_call.1}
  #allocation0 [shape = 'u32[]', space=smem, size = 0x4, offset = 0x4, fixed_abs, tag = 'smem constant byte address 0x4 - core index']
  #allocation1 [shape = 'u32[144,128]{1,0:T(1,128)}', space=vmem, size = 0x12000, scoped, tag = 'internal scratch']
  %s0 = inlined_call_operand.vmem [shape: f32[128,8], index: 0, kind: input, shape index: {}]
  %s1 = inlined_call_operand.hbm [shape: f32[400,128], index: 1, kind: input, shape index: {}]
  %s2 = inlined_call_operand.hbm [shape: f32[128,128], index: 2, kind: output, shape index: {}]
  %s3 = sld [smem:[#allocation0]]
  $region22: #{tpu_custom_call.1} parent=0
    _
  %s5 = ssub.s32 1, %s3
  %s6 = scalar_select 0, %s5, %s3
  $region1: #{tpu_custom_call.1} parent=0
    #allocation2 [shape = 'u8[204800]{0}', space=vmem, size = 0x32000, scoped, tag = 'input window, operand 1, single buffered']
    #allocation3 [shape = 's32[1]{0}', space=sflag, size = 0x4, scoped, tag = 'scoped memory for tpu_custom_call.1']
    #allocation4 [shape = 's32[1]{0}', space=sflag, size = 0x4, scoped, tag = 'scoped memory for tpu_custom_call.1']
    #allocation5 [shape = 'u8[65536]{0}', space=vmem, size = 0x10000, scoped, tag = 'output window, operand 0, single buffered']
    %7 = vsyncpa [#allocation3], 0
    %8 = vsyncpa [#allocation4], 0
    // Predicated region
    $region2: #{tpu_custom_call.1} parent=1 // pred_check
      _
    $region3: #{tpu_custom_call.1} parent=1 // pred_check_branch
      %10 = sbr.rel (0) target = $region5
    $region4: #{tpu_custom_call.1} parent=1 // pred_region
      _
    $region5: #{tpu_custom_call.1} parent=1 // pred_fallthru
      _
    // Predicated region
    $region6: #{tpu_custom_call.1} parent=1 // pred_check
      _
    $region7: #{tpu_custom_call.1} parent=1 // pred_check_branch
      %12 = sbr.rel (0) target = $region9
    $region8: #{tpu_custom_call.1} parent=1 // pred_region
      %s14 = ssub.s32 6400, 6400
      %15 = vsyncadd [#allocation3], %s14
      %s16 = sshll.u32 [#allocation2], 4
      %s17 = int_to_ptr.vmem [resolvable:$true] %s16
      %22 = dma.hbm_to_vmem [thread:$0]  %s1, 6400, %s17, [#allocation3], 128, 128, 8
    $region9: #{tpu_custom_call.1} parent=1 // pred_fallthru
      _
    // Predicated region
    $region10: #{tpu_custom_call.1} parent=1 // pred_check
      _
    $region11: #{tpu_custom_call.1} parent=1 // pred_check_branch
      %24 = sbr.rel (0) target = $region13
    $region12: #{tpu_custom_call.1} parent=1 // pred_region
      %25 = dma.done [#allocation3], 6400
    $region13: #{tpu_custom_call.1} parent=1 // pred_fallthru
      _
    %v26 = vld [vmem:[%s0] sm:$0xff]
    %v27 = vld [vmem:[%s0 + $0x8] sm:$0xff]
    %v28 = vld [vmem:[%s0 + $0x10] sm:$0xff]
    %v29 = vld [vmem:[%s0 + $0x18] sm:$0xff]
    %v30 = vld [vmem:[%s0 + $0x20] sm:$0xff]
    %v31 = vld [vmem:[%s0 + $0x28] sm:$0xff]
    %v32 = vld [vmem:[%s0 + $0x30] sm:$0xff]
    %v33 = vld [vmem:[%s0 + $0x38] sm:$0xff]
    %v34 = vld [vmem:[%s0 + $0x40] sm:$0xff]
    %v35 = vld [vmem:[%s0 + $0x48] sm:$0xff]
    %v36 = vld [vmem:[%s0 + $0x50] sm:$0xff]
    %v37 = vld [vmem:[%s0 + $0x58] sm:$0xff]
    %v38 = vld [vmem:[%s0 + $0x60] sm:$0xff]
    %v39 = vld [vmem:[%s0 + $0x68] sm:$0xff]
    %v40 = vld [vmem:[%s0 + $0x70] sm:$0xff]
    %v41 = vld [vmem:[%s0 + $0x78] sm:$0xff]
    %v42 = vld [vmem:[#allocation2] sm:$0xff]
    %v43 = vld [vmem:[#allocation2 + $0x8] sm:$0xff]
    %v44 = vld [vmem:[#allocation2 + $0x10] sm:$0xff]
    %v45 = vld [vmem:[#allocation2 + $0x18] sm:$0xff]
    %v46 = vld [vmem:[#allocation2 + $0x20] sm:$0xff]
    %v47 = vld [vmem:[#allocation2 + $0x28] sm:$0xff]
    %v48 = vld [vmem:[#allocation2 + $0x30] sm:$0xff]
    %v49 = vld [vmem:[#allocation2 + $0x38] sm:$0xff]
    %v50 = vld [vmem:[#allocation2 + $0x40] sm:$0xff]
    %v51 = vld [vmem:[#allocation2 + $0x48] sm:$0xff]
    %v52 = vld [vmem:[#allocation2 + $0x50] sm:$0xff]
    %v53 = vld [vmem:[#allocation2 + $0x58] sm:$0xff]
    %v54 = vld [vmem:[#allocation2 + $0x60] sm:$0xff]
    %v55 = vld [vmem:[#allocation2 + $0x68] sm:$0xff]
    %v56 = vld [vmem:[#allocation2 + $0x70] sm:$0xff]
    %v57 = vld [vmem:[#allocation2 + $0x78] sm:$0xff]
    %v58 = vld [vmem:[#allocation2 + $0x80] sm:$0xff]
    %v59 = vld [vmem:[#allocation2 + $0x88] sm:$0xff]
    %v60 = vld [vmem:[#allocation2 + $0x90] sm:$0xff]
    %v61 = vld [vmem:[#allocation2 + $0x98] sm:$0xff]
    %v62 = vld [vmem:[#allocation2 + $0xa0] sm:$0xff]
    %v63 = vld [vmem:[#allocation2 + $0xa8] sm:$0xff]
    %v64 = vld [vmem:[#allocation2 + $0xb0] sm:$0xff]
    %v65 = vld [vmem:[#allocation2 + $0xb8] sm:$0xff]
    %v66 = vld [vmem:[#allocation2 + $0xc0] sm:$0xff]
    %v67 = vld [vmem:[#allocation2 + $0xc8] sm:$0xff]
    %v68 = vld [vmem:[#allocation2 + $0xd0] sm:$0xff]
    %v69 = vld [vmem:[#allocation2 + $0xd8] sm:$0xff]
    %v70 = vld [vmem:[#allocation2 + $0xe0] sm:$0xff]
    %v71 = vld [vmem:[#allocation2 + $0xe8] sm:$0xff]
    %v72 = vld [vmem:[#allocation2 + $0xf0] sm:$0xff]
    %v73 = vld [vmem:[#allocation2 + $0xf8] sm:$0xff]
    %v74 = vld [vmem:[#allocation2 + $0x100] sm:$0xff]
    %v75 = vld [vmem:[#allocation2 + $0x108] sm:$0xff]
    %v76 = vld [vmem:[#allocation2 + $0x110] sm:$0xff]
    %v77 = vld [vmem:[#allocation2 + $0x118] sm:$0xff]
    %v78 = vld [vmem:[#allocation2 + $0x120] sm:$0xff]
    %v79 = vld [vmem:[#allocation2 + $0x128] sm:$0xff]
    %v80 = vld [vmem:[#allocation2 + $0x130] sm:$0xff]
    %v81 = vld [vmem:[#allocation2 + $0x138] sm:$0xff]
    %v82 = vld [vmem:[#allocation2 + $0x140] sm:$0xff]
    %v83 = vld [vmem:[#allocation2 + $0x148] sm:$0xff]
    %v84 = vld [vmem:[#allocation2 + $0x150] sm:$0xff]
    %v85 = vld [vmem:[#allocation2 + $0x158] sm:$0xff]
    %v86 = vld [vmem:[#allocation2 + $0x160] sm:$0xff]
    %v87 = vld [vmem:[#allocation2 + $0x168] sm:$0xff]
    %v88 = vld [vmem:[#allocation2 + $0x170] sm:$0xff]
    %v89 = vld [vmem:[#allocation2 + $0x178] sm:$0xff]
    %v90 = vld [vmem:[#allocation2 + $0x180] sm:$0xff]
    %v91 = vld [vmem:[#allocation2 + $0x188] sm:$0xff]
    %v92 = vlaneseq
    %v93 = vshrl.u32 %v92, 7
    %v94 = vsub.s32 0, %v93
    %v95 = vrot.slane %v91, %v94
    %vm96 = vcmask 64512
    %v98 = vsel %vm96, %v26, 0
    %v101 = vsel %vm96, %v27, 0
    %v104 = vsel %vm96, %v28, 0
    %v107 = vsel %vm96, %v29, 0
    %v110 = vsel %vm96, %v30, 0
    %v113 = vsel %vm96, %v31, 0
    %v116 = vsel %vm96, %v32, 0
    %v119 = vsel %vm96, %v33, 0
    %v122 = vsel %vm96, %v34, 0
    %v125 = vsel %vm96, %v35, 0
    %v128 = vsel %vm96, %v36, 0
    %v131 = vsel %vm96, %v37, 0
    %v134 = vsel %vm96, %v38, 0
    %v137 = vsel %vm96, %v39, 0
    %v140 = vsel %vm96, %v40, 0
    %v143 = vsel %vm96, %v41, 0
    %145 = vmatprep.subr.mxu0 0.0
    %146 = vmatpush1.msra.mxu0 %v42
    %147 = vmatprep.subr.mxu0 0.0
    %148 = vmatpush1.msra.mxu0 0.0
    %149 = vmatprep.subr.mxu0 0.0
    %150 = vmatpush1.msra.mxu0 0.0
    %151 = vmatprep.subr.mxu0 0.0
    %152 = vmatpush1.msra.mxu0 0.0
    %153 = vmatprep.subr.mxu0 0.0
    %154 = vmatpush1.msra.mxu0 0.0
    %155 = vmatprep.subr.mxu0 0.0
    %156 = vmatpush1.msra.mxu0 0.0
    %157 = vmatprep.subr.mxu0 0.0
    %158 = vmatpush1.msra.mxu0 0.0
    %159 = vmatprep.subr.mxu0 0.0
    %160 = vmatpush1.msra.mxu0 0.0
    %161 = vmatprep.subr.mxu0 0.0
    %162 = vmatpush1.msra.mxu0 0.0
    %163 = vmatprep.subr.mxu0 0.0
    %164 = vmatpush1.msra.mxu0 0.0
    %165 = vmatprep.subr.mxu0 0.0
    %166 = vmatpush1.msra.mxu0 0.0
    %167 = vmatprep.subr.mxu0 0.0
    %168 = vmatpush1.msra.mxu0 0.0
    %169 = vmatprep.subr.mxu0 0.0
    %170 = vmatpush1.msra.mxu0 0.0
    %171 = vmatprep.subr.mxu0 0.0
    %172 = vmatpush1.msra.mxu0 0.0
    %173 = vmatprep.subr.mxu0 0.0
    %174 = vmatpush1.msra.mxu0 0.0
    %175 = vmatprep.subr.mxu0 0.0
    %176 = vmatpush1.msra.mxu0 0.0
    %177 = vmatprep.subr.mxu0 0.0
    %178 = vmatpush1.msra.mxu0 0.0
    %179 = vmatprep.subr.mxu0 0.0
    %180 = vmatpush1.msra.mxu0 0.0
    %181 = vmatprep.subr.mxu0 0.0
    %182 = vmatpush1.msra.mxu0 0.0
    %183 = vmatprep.subr.mxu0 0.0
    %184 = vmatpush1.msra.mxu0 0.0
    %185 = vmatprep.subr.mxu0 0.0
    %186 = vmatpush1.msra.mxu0 0.0
    %187 = vmatprep.subr.mxu0 0.0
    %188 = vmatpush1.msra.mxu0 0.0
    %189 = vmatprep.subr.mxu0 0.0
    %190 = vmatpush1.msra.mxu0 0.0
    %191 = vmatprep.subr.mxu0 0.0
    %192 = vmatpush1.msra.mxu0 0.0
    %193 = vmatprep.subr.mxu0 0.0
    %194 = vmatpush1.msra.mxu0 0.0
    %195 = vmatprep.subr.mxu0 0.0
    %196 = vmatpush1.msra.mxu0 0.0
    %197 = vmatprep.subr.mxu0 0.0
    %198 = vmatpush1.msra.mxu0 0.0
    %199 = vmatprep.subr.mxu0 0.0
    %200 = vmatpush1.msra.mxu0 0.0
    %201 = vmatprep.subr.mxu0 0.0
    %202 = vmatpush1.msra.mxu0 0.0
    %203 = vmatprep.subr.mxu0 0.0
    %204 = vmatpush1.msra.mxu0 0.0
    %205 = vmatprep.subr.mxu0 0.0
    %206 = vmatpush1.msra.mxu0 0.0
    %207 = vmatprep.subr.mxu0 0.0
    %208 = vmatpush1.msra.mxu0 0.0
    %209 = vmatprep.mubr.f32.mxu0 0.0
    %210 = vmatmul.mubr.f32.gmra.mrb[0].mxu0 %v98
    %v211 = vpop.f32.mrb[0].mxu0
    %v212 = vadd.f32 %v95, %v211
    %v213 = vpop.f32.mrb[0].mxu0
    %214 = vmatprep.mubr.f32.mxu0 0.0
    %215 = vmatmul.mubr.f32.gmra.mrb[0].mxu0 %v101
    %v216 = vpop.f32.mrb[0].mxu0
    %v217 = vadd.f32 %v95, %v216
    %v218 = vpop.f32.mrb[0].mxu0
    %219 = vmatprep.mubr.f32.mxu0 0.0
    %220 = vmatmul.mubr.f32.gmra.mrb[0].mxu0 %v104
    %v221 = vpop.f32.mrb[0].mxu0
    %v222 = vadd.f32 %v95, %v221
    %v223 = vpop.f32.mrb[0].mxu0
    %224 = vmatprep.mubr.f32.mxu0 0.0
    %225 = vmatmul.mubr.f32.gmra.mrb[0].mxu0 %v107
    %v226 = vpop.f32.mrb[0].mxu0
    %v227 = vadd.f32 %v95, %v226
    %v228 = vpop.f32.mrb[0].mxu0
    %229 = vmatprep.mubr.f32.mxu0 0.0
    %230 = vmatmul.mubr.f32.gmra.mrb[0].mxu0 %v110
    %v231 = vpop.f32.mrb[0].mxu0
    %v232 = vadd.f32 %v95, %v231
    %v233 = vpop.f32.mrb[0].mxu0
    %234 = vmatprep.mubr.f32.mxu0 0.0
    %235 = vmatmul.mubr.f32.gmra.mrb[0].mxu0 %v113
    %v236 = vpop.f32.mrb[0].mxu0
    %v237 = vadd.f32 %v95, %v236
    %v238 = vpop.f32.mrb[0].mxu0
    %239 = vmatprep.mubr.f32.mxu0 0.0
    %240 = vmatmul.mubr.f32.gmra.mrb[0].mxu0 %v116
    %v241 = vpop.f32.mrb[0].mxu0
    %v242 = vadd.f32 %v95, %v241
    %v243 = vpop.f32.mrb[0].mxu0
    %244 = vmatprep.mubr.f32.mxu0 0.0
    %245 = vmatmul.mubr.f32.gmra.mrb[0].mxu0 %v119
    %v246 = vpop.f32.mrb[0].mxu0
    %v247 = vadd.f32 %v95, %v246
    %v248 = vpop.f32.mrb[0].mxu0
    %249 = vmatprep.mubr.f32.mxu0 0.0
    %250 = vmatmul.mubr.f32.gmra.mrb[0].mxu0 %v122
    %v251 = vpop.f32.mrb[0].mxu0
    %v252 = vadd.f32 %v95, %v251
    %v253 = vpop.f32.mrb[0].mxu0
    %254 = vmatprep.mubr.f32.mxu0 0.0
    %255 = vmatmul.mubr.f32.gmra.mrb[0].mxu0 %v125
    %v256 = vpop.f32.mrb[0].mxu0
    %v257 = vadd.f32 %v95, %v256
    %v258 = vpop.f32.mrb[0].mxu0
    %259 = vmatprep.mubr.f32.mxu0 0.0
    %260 = vmatmul.mubr.f32.gmra.mrb[0].mxu0 %v128
    %v261 = vpop.f32.mrb[0].mxu0
    %v262 = vadd.f32 %v95, %v261
    %v263 = vpop.f32.mrb[0].mxu0
    %264 = vmatprep.mubr.f32.mxu0 0.0
    %265 = vmatmul.mubr.f32.gmra.mrb[0].mxu0 %v131
    %v266 = vpop.f32.mrb[0].mxu0
    %v267 = vadd.f32 %v95, %v266
    %v268 = vpop.f32.mrb[0].mxu0
    %269 = vmatprep.mubr.f32.mxu0 0.0
    %270 = vmatmul.mubr.f32.gmra.mrb[0].mxu0 %v134
    %v271 = vpop.f32.mrb[0].mxu0
    %v272 = vadd.f32 %v95, %v271
    %v273 = vpop.f32.mrb[0].mxu0
    %274 = vmatprep.mubr.f32.mxu0 0.0
    %275 = vmatmul.mubr.f32.gmra.mrb[0].mxu0 %v137
    %v276 = vpop.f32.mrb[0].mxu0
    %v277 = vadd.f32 %v95, %v276
    %v278 = vpop.f32.mrb[0].mxu0
    %279 = vmatprep.mubr.f32.mxu0 0.0
    %280 = vmatmul.mubr.f32.gmra.mrb[0].mxu0 %v140
    %v281 = vpop.f32.mrb[0].mxu0
    %v282 = vadd.f32 %v95, %v281
    %v283 = vpop.f32.mrb[0].mxu0
    %284 = vmatprep.mubr.f32.mxu0 0.0
    %285 = vmatmul.mubr.f32.gmra.mrb[0].mxu0 %v143
    %v286 = vpop.f32.mrb[0].mxu0
    %v287 = vadd.f32 %v95, %v286
    %v288 = vpop.f32.mrb[0].mxu0
    %289 = vdwg.mxu0
    %v290 = vmax.f32 %v212, 0.0
    %v291 = vmax.f32 %v217, 0.0
    %v292 = vmax.f32 %v222, 0.0
    %v293 = vmax.f32 %v227, 0.0
    %v294 = vmax.f32 %v232, 0.0
    %v295 = vmax.f32 %v237, 0.0
    %v296 = vmax.f32 %v242, 0.0
    %v297 = vmax.f32 %v247, 0.0
    %v298 = vmax.f32 %v252, 0.0
    %v299 = vmax.f32 %v257, 0.0
    %v300 = vmax.f32 %v262, 0.0
    %v301 = vmax.f32 %v267, 0.0
    %v302 = vmax.f32 %v272, 0.0
    %v303 = vmax.f32 %v277, 0.0
    %v304 = vmax.f32 %v282, 0.0
    %v305 = vmax.f32 %v287, 0.0
    %v306 = vlaneseq
    %v307 = vshrl.u32 %v306, 7
    %v308 = vsub.s32 1, %v307
    %v309 = vrot.slane %v91, %v308
    %310 = vmatprep.subr.mxu0 0.0
    %311 = vmatpush1.msra.mxu0 %v43
    %312 = vmatprep.subr.mxu0 0.0
    %313 = vmatpush1.msra.mxu0 %v44
    %314 = vmatprep.subr.mxu0 0.0
    %315 = vmatpush1.msra.mxu0 %v45
    %316 = vmatprep.subr.mxu0 0.0
    %317 = vmatpush1.msra.mxu0 %v46
    %318 = vmatprep.subr.mxu0 0.0
    %319 = vmatpush1.msra.mxu0 %v47
    %320 = vmatprep.subr.mxu0 0.0
    %321 = vmatpush1.msra.mxu0 %v48
    %322 = vmatprep.subr.mxu0 0.0
    %323 = vmatpush1.msra.mxu0 %v49
    %324 = vmatprep.subr.mxu0 0.0
    %325 = vmatpush1.msra.mxu0 %v50
    %326 = vmatprep.subr.mxu0 0.0
    %327 = vmatpush1.msra.mxu0 %v51
    %328 = vmatprep.subr.mxu0 0.0
    %329 = vmatpush1.msra.mxu0 %v52
    %330 = vmatprep.subr.mxu0 0.0
    %331 = vmatpush1.msra.mxu0 %v53
    %332 = vmatprep.subr.mxu0 0.0
    %333 = vmatpush1.msra.mxu0 %v54
    %334 = vmatprep.subr.mxu0 0.0
    %335 = vmatpush1.msra.mxu0 %v55
    %336 = vmatprep.subr.mxu0 0.0
    %337 = vmatpush1.msra.mxu0 %v56
    %338 = vmatprep.subr.mxu0 0.0
    %339 = vmatpush1.msra.mxu0 %v57
    %340 = vmatprep.subr.mxu0 0.0
    %341 = vmatpush1.msra.mxu0 %v58
    %342 = vmatprep.subr.mxu0 0.0
    %343 = vmatpush1.msra.mxu0 0.0
    %344 = vmatprep.subr.mxu0 0.0
    %345 = vmatpush1.msra.mxu0 0.0
    %346 = vmatprep.subr.mxu0 0.0
    %347 = vmatpush1.msra.mxu0 0.0
    %348 = vmatprep.subr.mxu0 0.0
    %349 = vmatpush1.msra.mxu0 0.0
    %350 = vmatprep.subr.mxu0 0.0
    %351 = vmatpush1.msra.mxu0 0.0
    %352 = vmatprep.subr.mxu0 0.0
    %353 = vmatpush1.msra.mxu0 0.0
    %354 = vmatprep.subr.mxu0 0.0
    %355 = vmatpush1.msra.mxu0 0.0
    %356 = vmatprep.subr.mxu0 0.0
    %357 = vmatpush1.msra.mxu0 0.0
    %358 = vmatprep.subr.mxu0 0.0
    %359 = vmatpush1.msra.mxu0 0.0
    %360 = vmatprep.subr.mxu0 0.0
    %361 = vmatpush1.msra.mxu0 0.0
    %362 = vmatprep.subr.mxu0 0.0
    %363 = vmatpush1.msra.mxu0 0.0
    %364 = vmatprep.subr.mxu0 0.0
    %365 = vmatpush1.msra.mxu0 0.0
    %366 = vmatprep.subr.mxu0 0.0
    %367 = vmatpush1.msra.mxu0 0.0
    %368 = vmatprep.subr.mxu0 0.0
    %369 = vmatpush1.msra.mxu0 0.0
    %370 = vmatprep.subr.mxu0 0.0
    %371 = vmatpush1.msra.mxu0 0.0
    %372 = vmatprep.subr.mxu0 0.0
    %373 = vmatpush1.msra.mxu0 0.0
    %374 = vmatprep.mubr.f32.mxu0 0.0
    %375 = vmatmul.mubr.f32.gmra.mrb[0].mxu0 %v290
    %v376 = vpop.f32.mrb[0].mxu0
    %v377 = vadd.f32 %v309, %v376
    %v378 = vpop.f32.mrb[0].mxu0
    %379 = vmatprep.mubr.f32.mxu0 0.0
    %380 = vmatmul.mubr.f32.gmra.mrb[0].mxu0 %v291
    %v381 = vpop.f32.mrb[0].mxu0
    %v382 = vadd.f32 %v309, %v381
    %v383 = vpop.f32.mrb[0].mxu0
    %384 = vmatprep.mubr.f32.mxu0 0.0
    %385 = vmatmul.mubr.f32.gmra.mrb[0].mxu0 %v292
    %v386 = vpop.f32.mrb[0].mxu0
    %v387 = vadd.f32 %v309, %v386
    %v388 = vpop.f32.mrb[0].mxu0
    %389 = vmatprep.mubr.f32.mxu0 0.0
    %390 = vmatmul.mubr.f32.gmra.mrb[0].mxu0 %v293
    %v391 = vpop.f32.mrb[0].mxu0
    %v392 = vadd.f32 %v309, %v391
    %v393 = vpop.f32.mrb[0].mxu0
    %394 = vmatprep.mubr.f32.mxu0 0.0
    %395 = vmatmul.mubr.f32.gmra.mrb[0].mxu0 %v294
    %v396 = vpop.f32.mrb[0].mxu0
    %v397 = vadd.f32 %v309, %v396
    %v398 = vpop.f32.mrb[0].mxu0
    %399 = vmatprep.mubr.f32.mxu0 0.0
    %400 = vmatmul.mubr.f32.gmra.mrb[0].mxu0 %v295
    %v401 = vpop.f32.mrb[0].mxu0
    %v402 = vadd.f32 %v309, %v401
    %v403 = vpop.f32.mrb[0].mxu0
    %404 = vmatprep.mubr.f32.mxu0 0.0
    %405 = vmatmul.mubr.f32.gmra.mrb[0].mxu0 %v296
    %v406 = vpop.f32.mrb[0].mxu0
    %v407 = vadd.f32 %v309, %v406
    %v408 = vpop.f32.mrb[0].mxu0
    %409 = vmatprep.mubr.f32.mxu0 0.0
    %410 = vmatmul.mubr.f32.gmra.mrb[0].mxu0 %v297
    %v411 = vpop.f32.mrb[0].mxu0
    %v412 = vadd.f32 %v309, %v411
    %v413 = vpop.f32.mrb[0].mxu0
    %414 = vmatprep.mubr.f32.mxu0 0.0
    %415 = vmatmul.mubr.f32.gmra.mrb[0].mxu0 %v298
    %v416 = vpop.f32.mrb[0].mxu0
    %v417 = vadd.f32 %v309, %v416
    %v418 = vpop.f32.mrb[0].mxu0
    %419 = vmatprep.mubr.f32.mxu0 0.0
    %420 = vmatmul.mubr.f32.gmra.mrb[0].mxu0 %v299
    %v421 = vpop.f32.mrb[0].mxu0
    %v422 = vadd.f32 %v309, %v421
    %v423 = vpop.f32.mrb[0].mxu0
    %424 = vmatprep.mubr.f32.mxu0 0.0
    %425 = vmatmul.mubr.f32.gmra.mrb[0].mxu0 %v300
    %v426 = vpop.f32.mrb[0].mxu0
    %v427 = vadd.f32 %v309, %v426
    %v428 = vpop.f32.mrb[0].mxu0
    %429 = vmatprep.mubr.f32.mxu0 0.0
    %430 = vmatmul.mubr.f32.gmra.mrb[0].mxu0 %v301
    %v431 = vpop.f32.mrb[0].mxu0
    %v432 = vadd.f32 %v309, %v431
    %v433 = vpop.f32.mrb[0].mxu0
    %434 = vmatprep.mubr.f32.mxu0 0.0
    %435 = vmatmul.mubr.f32.gmra.mrb[0].mxu0 %v302
    %v436 = vpop.f32.mrb[0].mxu0
    %v437 = vadd.f32 %v309, %v436
    %v438 = vpop.f32.mrb[0].mxu0
    %439 = vmatprep.mubr.f32.mxu0 0.0
    %440 = vmatmul.mubr.f32.gmra.mrb[0].mxu0 %v303
    %v441 = vpop.f32.mrb[0].mxu0
    %v442 = vadd.f32 %v309, %v441
    %v443 = vpop.f32.mrb[0].mxu0
    %444 = vmatprep.mubr.f32.mxu0 0.0
    %445 = vmatmul.mubr.f32.gmra.mrb[0].mxu0 %v304
    %v446 = vpop.f32.mrb[0].mxu0
    %v447 = vadd.f32 %v309, %v446
    %v448 = vpop.f32.mrb[0].mxu0
    %449 = vmatprep.mubr.f32.mxu0 0.0
    %450 = vmatmul.mubr.f32.gmra.mrb[0].mxu0 %v305
    %v451 = vpop.f32.mrb[0].mxu0
    %v452 = vadd.f32 %v309, %v451
    %v453 = vpop.f32.mrb[0].mxu0
    %454 = vdwg.mxu0
    %v455 = vmax.f32 %v377, 0.0
    %v456 = vmax.f32 %v382, 0.0
    %v457 = vmax.f32 %v387, 0.0
    %v458 = vmax.f32 %v392, 0.0
    %v459 = vmax.f32 %v397, 0.0
    %v460 = vmax.f32 %v402, 0.0
    %v461 = vmax.f32 %v407, 0.0
    %v462 = vmax.f32 %v412, 0.0
    %v463 = vmax.f32 %v417, 0.0
    %v464 = vmax.f32 %v422, 0.0
    %v465 = vmax.f32 %v427, 0.0
    %v466 = vmax.f32 %v432, 0.0
    %v467 = vmax.f32 %v437, 0.0
    %v468 = vmax.f32 %v442, 0.0
    %v469 = vmax.f32 %v447, 0.0
    %v470 = vmax.f32 %v452, 0.0
    %v471 = vlaneseq
    %v472 = vshrl.u32 %v471, 7
    %v473 = vsub.s32 2, %v472
    %v474 = vrot.slane %v91, %v473
    %475 = vmatprep.subr.mxu0 0.0
    %476 = vmatpush1.msra.mxu0 %v59
    %477 = vmatprep.subr.mxu0 0.0
    %478 = vmatpush1.msra.mxu0 %v60
    %479 = vmatprep.subr.mxu0 0.0
    %480 = vmatpush1.msra.mxu0 %v61
    %481 = vmatprep.subr.mxu0 0.0
    %482 = vmatpush1.msra.mxu0 %v62
    %483 = vmatprep.subr.mxu0 0.0
    %484 = vmatpush1.msra.mxu0 %v63
    %485 = vmatprep.subr.mxu0 0.0
    %486 = vmatpush1.msra.mxu0 %v64
    %487 = vmatprep.subr.mxu0 0.0
    %488 = vmatpush1.msra.mxu0 %v65
    %489 = vmatprep.subr.mxu0 0.0
    %490 = vmatpush1.msra.mxu0 %v66
    %491 = vmatprep.subr.mxu0 0.0
    %492 = vmatpush1.msra.mxu0 %v67
    %493 = vmatprep.subr.mxu0 0.0
    %494 = vmatpush1.msra.mxu0 %v68
    %495 = vmatprep.subr.mxu0 0.0
    %496 = vmatpush1.msra.mxu0 %v69
    %497 = vmatprep.subr.mxu0 0.0
    %498 = vmatpush1.msra.mxu0 %v70
    %499 = vmatprep.subr.mxu0 0.0
    %500 = vmatpush1.msra.mxu0 %v71
    %501 = vmatprep.subr.mxu0 0.0
    %502 = vmatpush1.msra.mxu0 %v72
    %503 = vmatprep.subr.mxu0 0.0
    %504 = vmatpush1.msra.mxu0 %v73
    %505 = vmatprep.subr.mxu0 0.0
    %506 = vmatpush1.msra.mxu0 %v74
    %507 = vmatprep.subr.mxu0 0.0
    %508 = vmatpush1.msra.mxu0 0.0
    %509 = vmatprep.subr.mxu0 0.0
    %510 = vmatpush1.msra.mxu0 0.0
    %511 = vmatprep.subr.mxu0 0.0
    %512 = vmatpush1.msra.mxu0 0.0
    %513 = vmatprep.subr.mxu0 0.0
    %514 = vmatpush1.msra.mxu0 0.0
    %515 = vmatprep.subr.mxu0 0.0
    %516 = vmatpush1.msra.mxu0 0.0
    %517 = vmatprep.subr.mxu0 0.0
    %518 = vmatpush1.msra.mxu0 0.0
    %519 = vmatprep.subr.mxu0 0.0
    %520 = vmatpush1.msra.mxu0 0.0
    %521 = vmatprep.subr.mxu0 0.0
    %522 = vmatpush1.msra.mxu0 0.0
    %523 = vmatprep.subr.mxu0 0.0
    %524 = vmatpush1.msra.mxu0 0.0
    %525 = vmatprep.subr.mxu0 0.0
    %526 = vmatpush1.msra.mxu0 0.0
    %527 = vmatprep.subr.mxu0 0.0
    %528 = vmatpush1.msra.mxu0 0.0
    %529 = vmatprep.subr.mxu0 0.0
    %530 = vmatpush1.msra.mxu0 0.0
    %531 = vmatprep.subr.mxu0 0.0
    %532 = vmatpush1.msra.mxu0 0.0
    %533 = vmatprep.subr.mxu0 0.0
    %534 = vmatpush1.msra.mxu0 0.0
    %535 = vmatprep.subr.mxu0 0.0
    %536 = vmatpush1.msra.mxu0 0.0
    %537 = vmatprep.subr.mxu0 0.0
    %538 = vmatpush1.msra.mxu0 0.0
    %539 = vmatprep.mubr.f32.mxu0 0.0
    %540 = vmatmul.mubr.f32.gmra.mrb[0].mxu0 %v455
    %v541 = vpop.f32.mrb[0].mxu0
    %v542 = vadd.f32 %v474, %v541
    %v543 = vpop.f32.mrb[0].mxu0
    %544 = vmatprep.mubr.f32.mxu0 0.0
    %545 = vmatmul.mubr.f32.gmra.mrb[0].mxu0 %v456
    %v546 = vpop.f32.mrb[0].mxu0
    %v547 = vadd.f32 %v474, %v546
    %v548 = vpop.f32.mrb[0].mxu0
    %549 = vmatprep.mubr.f32.mxu0 0.0
    %550 = vmatmul.mubr.f32.gmra.mrb[0].mxu0 %v457
    %v551 = vpop.f32.mrb[0].mxu0
    %v552 = vadd.f32 %v474, %v551
    %v553 = vpop.f32.mrb[0].mxu0
    %554 = vmatprep.mubr.f32.mxu0 0.0
    %555 = vmatmul.mubr.f32.gmra.mrb[0].mxu0 %v458
    %v556 = vpop.f32.mrb[0].mxu0
    %v557 = vadd.f32 %v474, %v556
    %v558 = vpop.f32.mrb[0].mxu0
    %559 = vmatprep.mubr.f32.mxu0 0.0
    %560 = vmatmul.mubr.f32.gmra.mrb[0].mxu0 %v459
    %v561 = vpop.f32.mrb[0].mxu0
    %v562 = vadd.f32 %v474, %v561
    %v563 = vpop.f32.mrb[0].mxu0
    %564 = vmatprep.mubr.f32.mxu0 0.0
    %565 = vmatmul.mubr.f32.gmra.mrb[0].mxu0 %v460
    %v566 = vpop.f32.mrb[0].mxu0
    %v567 = vadd.f32 %v474, %v566
    %v568 = vpop.f32.mrb[0].mxu0
    %569 = vmatprep.mubr.f32.mxu0 0.0
    %570 = vmatmul.mubr.f32.gmra.mrb[0].mxu0 %v461
    %v571 = vpop.f32.mrb[0].mxu0
    %v572 = vadd.f32 %v474, %v571
    %v573 = vpop.f32.mrb[0].mxu0
    %574 = vmatprep.mubr.f32.mxu0 0.0
    %575 = vmatmul.mubr.f32.gmra.mrb[0].mxu0 %v462
    %v576 = vpop.f32.mrb[0].mxu0
    %v577 = vadd.f32 %v474, %v576
    %v578 = vpop.f32.mrb[0].mxu0
    %579 = vmatprep.mubr.f32.mxu0 0.0
    %580 = vmatmul.mubr.f32.gmra.mrb[0].mxu0 %v463
    %v581 = vpop.f32.mrb[0].mxu0
    %v582 = vadd.f32 %v474, %v581
    %v583 = vpop.f32.mrb[0].mxu0
    %584 = vmatprep.mubr.f32.mxu0 0.0
    %585 = vmatmul.mubr.f32.gmra.mrb[0].mxu0 %v464
    %v586 = vpop.f32.mrb[0].mxu0
    %v587 = vadd.f32 %v474, %v586
    %v588 = vpop.f32.mrb[0].mxu0
    %589 = vmatprep.mubr.f32.mxu0 0.0
    %590 = vmatmul.mubr.f32.gmra.mrb[0].mxu0 %v465
    %v591 = vpop.f32.mrb[0].mxu0
    %v592 = vadd.f32 %v474, %v591
    %v593 = vpop.f32.mrb[0].mxu0
    %594 = vmatprep.mubr.f32.mxu0 0.0
    %595 = vmatmul.mubr.f32.gmra.mrb[0].mxu0 %v466
    %v596 = vpop.f32.mrb[0].mxu0
    %v597 = vadd.f32 %v474, %v596
    %v598 = vpop.f32.mrb[0].mxu0
    %599 = vmatprep.mubr.f32.mxu0 0.0
    %600 = vmatmul.mubr.f32.gmra.mrb[0].mxu0 %v467
    %v601 = vpop.f32.mrb[0].mxu0
    %v602 = vadd.f32 %v474, %v601
    %v603 = vpop.f32.mrb[0].mxu0
    %604 = vmatprep.mubr.f32.mxu0 0.0
    %605 = vmatmul.mubr.f32.gmra.mrb[0].mxu0 %v468
    %v606 = vpop.f32.mrb[0].mxu0
    %v607 = vadd.f32 %v474, %v606
    %v608 = vpop.f32.mrb[0].mxu0
    %609 = vmatprep.mubr.f32.mxu0 0.0
    %610 = vmatmul.mubr.f32.gmra.mrb[0].mxu0 %v469
    %v611 = vpop.f32.mrb[0].mxu0
    %v612 = vadd.f32 %v474, %v611
    %v613 = vpop.f32.mrb[0].mxu0
    %614 = vmatprep.mubr.f32.mxu0 0.0
    %615 = vmatmul.mubr.f32.gmra.mrb[0].mxu0 %v470
    %v616 = vpop.f32.mrb[0].mxu0
    %v617 = vadd.f32 %v474, %v616
    %v618 = vpop.f32.mrb[0].mxu0
    %619 = vdwg.mxu0
    %v620 = vmax.f32 %v542, 0.0
    %v621 = vmax.f32 %v547, 0.0
    %v622 = vmax.f32 %v552, 0.0
    %v623 = vmax.f32 %v557, 0.0
    %v624 = vmax.f32 %v562, 0.0
    %v625 = vmax.f32 %v567, 0.0
    %v626 = vmax.f32 %v572, 0.0
    %v627 = vmax.f32 %v577, 0.0
    %v628 = vmax.f32 %v582, 0.0
    %v629 = vmax.f32 %v587, 0.0
    %v630 = vmax.f32 %v592, 0.0
    %v631 = vmax.f32 %v597, 0.0
    %v632 = vmax.f32 %v602, 0.0
    %v633 = vmax.f32 %v607, 0.0
    %v634 = vmax.f32 %v612, 0.0
    %v635 = vmax.f32 %v617, 0.0
    %v636 = vlaneseq
    %v637 = vshrl.u32 %v636, 7
    %v638 = vsub.s32 3, %v637
    %v639 = vrot.slane %v91, %v638
    %640 = vmatprep.subr.mxu0 0.0
    %641 = vmatpush1.msra.mxu0 %v75
    %642 = vmatprep.subr.mxu0 0.0
    %643 = vmatpush1.msra.mxu0 %v76
    %644 = vmatprep.subr.mxu0 0.0
    %645 = vmatpush1.msra.mxu0 %v77
    %646 = vmatprep.subr.mxu0 0.0
    %647 = vmatpush1.msra.mxu0 %v78
    %648 = vmatprep.subr.mxu0 0.0
    %649 = vmatpush1.msra.mxu0 %v79
    %650 = vmatprep.subr.mxu0 0.0
    %651 = vmatpush1.msra.mxu0 %v80
    %652 = vmatprep.subr.mxu0 0.0
    %653 = vmatpush1.msra.mxu0 %v81
    %654 = vmatprep.subr.mxu0 0.0
    %655 = vmatpush1.msra.mxu0 %v82
    %656 = vmatprep.subr.mxu0 0.0
    %657 = vmatpush1.msra.mxu0 %v83
    %658 = vmatprep.subr.mxu0 0.0
    %659 = vmatpush1.msra.mxu0 %v84
    %660 = vmatprep.subr.mxu0 0.0
    %661 = vmatpush1.msra.mxu0 %v85
    %662 = vmatprep.subr.mxu0 0.0
    %663 = vmatpush1.msra.mxu0 %v86
    %664 = vmatprep.subr.mxu0 0.0
    %665 = vmatpush1.msra.mxu0 %v87
    %666 = vmatprep.subr.mxu0 0.0
    %667 = vmatpush1.msra.mxu0 %v88
    %668 = vmatprep.subr.mxu0 0.0
    %669 = vmatpush1.msra.mxu0 %v89
    %670 = vmatprep.subr.mxu0 0.0
    %671 = vmatpush1.msra.mxu0 %v90
    %672 = vmatprep.subr.mxu0 0.0
    %673 = vmatpush1.msra.mxu0 0.0
    %674 = vmatprep.subr.mxu0 0.0
    %675 = vmatpush1.msra.mxu0 0.0
    %676 = vmatprep.subr.mxu0 0.0
    %677 = vmatpush1.msra.mxu0 0.0
    %678 = vmatprep.subr.mxu0 0.0
    %679 = vmatpush1.msra.mxu0 0.0
    %680 = vmatprep.subr.mxu0 0.0
    %681 = vmatpush1.msra.mxu0 0.0
    %682 = vmatprep.subr.mxu0 0.0
    %683 = vmatpush1.msra.mxu0 0.0
    %684 = vmatprep.subr.mxu0 0.0
    %685 = vmatpush1.msra.mxu0 0.0
    %686 = vmatprep.subr.mxu0 0.0
    %687 = vmatpush1.msra.mxu0 0.0
    %688 = vmatprep.subr.mxu0 0.0
    %689 = vmatpush1.msra.mxu0 0.0
    %690 = vmatprep.subr.mxu0 0.0
    %691 = vmatpush1.msra.mxu0 0.0
    %692 = vmatprep.subr.mxu0 0.0
    %693 = vmatpush1.msra.mxu0 0.0
    %694 = vmatprep.subr.mxu0 0.0
    %695 = vmatpush1.msra.mxu0 0.0
    %696 = vmatprep.subr.mxu0 0.0
    %697 = vmatpush1.msra.mxu0 0.0
    %698 = vmatprep.subr.mxu0 0.0
    %699 = vmatpush1.msra.mxu0 0.0
    %700 = vmatprep.subr.mxu0 0.0
    %701 = vmatpush1.msra.mxu0 0.0
    %702 = vmatprep.subr.mxu0 0.0
    %703 = vmatpush1.msra.mxu0 0.0
    %704 = vmatprep.mubr.f32.mxu0 0.0
    %705 = vmatmul.mubr.f32.gmra.mrb[0].mxu0 %v620
    %v706 = vpop.f32.mrb[0].mxu0
    %v707 = vadd.f32 %v639, %v706
    %v708 = vpop.f32.mrb[0].mxu0
    %709 = vmatprep.mubr.f32.mxu0 0.0
    %710 = vmatmul.mubr.f32.gmra.mrb[0].mxu0 %v621
    %v711 = vpop.f32.mrb[0].mxu0
    %v712 = vadd.f32 %v639, %v711
    %v713 = vpop.f32.mrb[0].mxu0
    %714 = vmatprep.mubr.f32.mxu0 0.0
    %715 = vmatmul.mubr.f32.gmra.mrb[0].mxu0 %v622
    %v716 = vpop.f32.mrb[0].mxu0
    %v717 = vadd.f32 %v639, %v716
    %v718 = vpop.f32.mrb[0].mxu0
    %719 = vmatprep.mubr.f32.mxu0 0.0
    %720 = vmatmul.mubr.f32.gmra.mrb[0].mxu0 %v623
    %v721 = vpop.f32.mrb[0].mxu0
    %v722 = vadd.f32 %v639, %v721
    %v723 = vpop.f32.mrb[0].mxu0
    %724 = vmatprep.mubr.f32.mxu0 0.0
    %725 = vmatmul.mubr.f32.gmra.mrb[0].mxu0 %v624
    %v726 = vpop.f32.mrb[0].mxu0
    %v727 = vadd.f32 %v639, %v726
    %v728 = vpop.f32.mrb[0].mxu0
    %729 = vmatprep.mubr.f32.mxu0 0.0
    %730 = vmatmul.mubr.f32.gmra.mrb[0].mxu0 %v625
    %v731 = vpop.f32.mrb[0].mxu0
    %v732 = vadd.f32 %v639, %v731
    %v733 = vpop.f32.mrb[0].mxu0
    %734 = vmatprep.mubr.f32.mxu0 0.0
    %735 = vmatmul.mubr.f32.gmra.mrb[0].mxu0 %v626
    %v736 = vpop.f32.mrb[0].mxu0
    %v737 = vadd.f32 %v639, %v736
    %v738 = vpop.f32.mrb[0].mxu0
    %739 = vmatprep.mubr.f32.mxu0 0.0
    %740 = vmatmul.mubr.f32.gmra.mrb[0].mxu0 %v627
    %v741 = vpop.f32.mrb[0].mxu0
    %v742 = vadd.f32 %v639, %v741
    %v743 = vpop.f32.mrb[0].mxu0
    %744 = vmatprep.mubr.f32.mxu0 0.0
    %745 = vmatmul.mubr.f32.gmra.mrb[0].mxu0 %v628
    %v746 = vpop.f32.mrb[0].mxu0
    %v747 = vadd.f32 %v639, %v746
    %v748 = vpop.f32.mrb[0].mxu0
    %749 = vmatprep.mubr.f32.mxu0 0.0
    %750 = vmatmul.mubr.f32.gmra.mrb[0].mxu0 %v629
    %v751 = vpop.f32.mrb[0].mxu0
    %v752 = vadd.f32 %v639, %v751
    %v753 = vpop.f32.mrb[0].mxu0
    %754 = vmatprep.mubr.f32.mxu0 0.0
    %755 = vmatmul.mubr.f32.gmra.mrb[0].mxu0 %v630
    %v756 = vpop.f32.mrb[0].mxu0
    %v757 = vadd.f32 %v639, %v756
    %v758 = vpop.f32.mrb[0].mxu0
    %759 = vmatprep.mubr.f32.mxu0 0.0
    %760 = vmatmul.mubr.f32.gmra.mrb[0].mxu0 %v631
    %v761 = vpop.f32.mrb[0].mxu0
    %v762 = vadd.f32 %v639, %v761
    %v763 = vpop.f32.mrb[0].mxu0
    %764 = vmatprep.mubr.f32.mxu0 0.0
    %765 = vmatmul.mubr.f32.gmra.mrb[0].mxu0 %v632
    %v766 = vpop.f32.mrb[0].mxu0
    %v767 = vadd.f32 %v639, %v766
    %v768 = vpop.f32.mrb[0].mxu0
    %769 = vmatprep.mubr.f32.mxu0 0.0
    %770 = vmatmul.mubr.f32.gmra.mrb[0].mxu0 %v633
    %v771 = vpop.f32.mrb[0].mxu0
    %v772 = vadd.f32 %v639, %v771
    %v773 = vpop.f32.mrb[0].mxu0
    %774 = vmatprep.mubr.f32.mxu0 0.0
    %775 = vmatmul.mubr.f32.gmra.mrb[0].mxu0 %v634
    %v776 = vpop.f32.mrb[0].mxu0
    %v777 = vadd.f32 %v639, %v776
    %v778 = vpop.f32.mrb[0].mxu0
    %779 = vmatprep.mubr.f32.mxu0 0.0
    %780 = vmatmul.mubr.f32.gmra.mrb[0].mxu0 %v635
    %v781 = vpop.f32.mrb[0].mxu0
    %v782 = vadd.f32 %v639, %v781
    %v783 = vpop.f32.mrb[0].mxu0
    %784 = vdwg.mxu0
    %v785 = vlaneseq
    %v786 = vand.u32 %v785, 127
    %vm787 = vcmp.lt.s32.totalorder %v786, 3
    %v788 = vsel %vm787, %v707, -1e+30
    %v789 = vsel %vm787, %v712, -1e+30
    %v790 = vsel %vm787, %v717, -1e+30
    %v791 = vsel %vm787, %v722, -1e+30
    %v792 = vsel %vm787, %v727, -1e+30
    %v793 = vsel %vm787, %v732, -1e+30
    %v794 = vsel %vm787, %v737, -1e+30
    %v795 = vsel %vm787, %v742, -1e+30
    %v796 = vsel %vm787, %v747, -1e+30
    %v797 = vsel %vm787, %v752, -1e+30
    %v798 = vsel %vm787, %v757, -1e+30
    %v799 = vsel %vm787, %v762, -1e+30
    %v800 = vsel %vm787, %v767, -1e+30
    %v801 = vsel %vm787, %v772, -1e+30
    %v802 = vsel %vm787, %v777, -1e+30
    %v803 = vsel %vm787, %v782, -1e+30
    %804 = vmax.xlane.f32.xlu0 %v788
    %v805 = vpop.xlane.xlu0 %804
    %806 = vmax.xlane.f32.xlu0 %v789
    %v807 = vpop.xlane.xlu0 %806
    %808 = vmax.xlane.f32.xlu0 %v790
    %v809 = vpop.xlane.xlu0 %808
    %810 = vmax.xlane.f32.xlu0 %v791
    %v811 = vpop.xlane.xlu0 %810
    %812 = vmax.xlane.f32.xlu0 %v792
    %v813 = vpop.xlane.xlu0 %812
    %814 = vmax.xlane.f32.xlu0 %v793
    %v815 = vpop.xlane.xlu0 %814
    %816 = vmax.xlane.f32.xlu0 %v794
    %v817 = vpop.xlane.xlu0 %816
    %818 = vmax.xlane.f32.xlu0 %v795
    %v819 = vpop.xlane.xlu0 %818
    %820 = vmax.xlane.f32.xlu0 %v796
    %v821 = vpop.xlane.xlu0 %820
    %822 = vmax.xlane.f32.xlu0 %v797
    %v823 = vpop.xlane.xlu0 %822
    %824 = vmax.xlane.f32.xlu0 %v798
    %v825 = vpop.xlane.xlu0 %824
    %826 = vmax.xlane.f32.xlu0 %v799
    %v827 = vpop.xlane.xlu0 %826
    %828 = vmax.xlane.f32.xlu0 %v800
    %v829 = vpop.xlane.xlu0 %828
    %830 = vmax.xlane.f32.xlu0 %v801
    %v831 = vpop.xlane.xlu0 %830
    %832 = vmax.xlane.f32.xlu0 %v802
    %v833 = vpop.xlane.xlu0 %832
    %834 = vmax.xlane.f32.xlu0 %v803
    %v835 = vpop.xlane.xlu0 %834
    %v836 = vsub.f32 %v788, %v805
    %v837 = vsub.f32 %v789, %v807
    %v838 = vsub.f32 %v790, %v809
    %v839 = vsub.f32 %v791, %v811
    %v840 = vsub.f32 %v792, %v813
    %v841 = vsub.f32 %v793, %v815
    %v842 = vsub.f32 %v794, %v817
    %v843 = vsub.f32 %v795, %v819
    %v844 = vsub.f32 %v796, %v821
    %v845 = vsub.f32 %v797, %v823
    %v846 = vsub.f32 %v798, %v825
    %v847 = vsub.f32 %v799, %v827
    %v848 = vsub.f32 %v800, %v829
    %v849 = vsub.f32 %v801, %v831
    %v850 = vsub.f32 %v802, %v833
    %v851 = vsub.f32 %v803, %v835
    %v852 = vmul.f32 %v836, 1.442695
    %v853 = vpow.pop %v852
    %v854 = vmul.f32 %v837, 1.442695
    %v855 = vpow.pop %v854
    %v856 = vmul.f32 %v838, 1.442695
    %v857 = vpow.pop %v856
    %v858 = vmul.f32 %v839, 1.442695
    %v859 = vpow.pop %v858
    %v860 = vmul.f32 %v840, 1.442695
    %v861 = vpow.pop %v860
    %v862 = vmul.f32 %v841, 1.442695
    %v863 = vpow.pop %v862
    %v864 = vmul.f32 %v842, 1.442695
    %v865 = vpow.pop %v864
    %v866 = vmul.f32 %v843, 1.442695
    %v867 = vpow.pop %v866
    %v868 = vmul.f32 %v844, 1.442695
    %v869 = vpow.pop %v868
    %v870 = vmul.f32 %v845, 1.442695
    %v871 = vpow.pop %v870
    %v872 = vmul.f32 %v846, 1.442695
    %v873 = vpow.pop %v872
    %v874 = vmul.f32 %v847, 1.442695
    %v875 = vpow.pop %v874
    %v876 = vmul.f32 %v848, 1.442695
    %v877 = vpow.pop %v876
    %v878 = vmul.f32 %v849, 1.442695
    %v879 = vpow.pop %v878
    %v880 = vmul.f32 %v850, 1.442695
    %v881 = vpow.pop %v880
    %v882 = vmul.f32 %v851, 1.442695
    %v883 = vpow.pop %v882
    %884 = vadd.xlane.f32.xlu0 %v853
    %v885 = vpop.xlane.xlu0 %884
    %886 = vadd.xlane.f32.xlu0 %v855
    %v887 = vpop.xlane.xlu0 %886
    %888 = vadd.xlane.f32.xlu0 %v857
    %v889 = vpop.xlane.xlu0 %888
    %890 = vadd.xlane.f32.xlu0 %v859
    %v891 = vpop.xlane.xlu0 %890
    %892 = vadd.xlane.f32.xlu0 %v861
    %v893 = vpop.xlane.xlu0 %892
    %894 = vadd.xlane.f32.xlu0 %v863
    %v895 = vpop.xlane.xlu0 %894
    %896 = vadd.xlane.f32.xlu0 %v865
    %v897 = vpop.xlane.xlu0 %896
    %898 = vadd.xlane.f32.xlu0 %v867
    %v899 = vpop.xlane.xlu0 %898
    %900 = vadd.xlane.f32.xlu0 %v869
    %v901 = vpop.xlane.xlu0 %900
    %902 = vadd.xlane.f32.xlu0 %v871
    %v903 = vpop.xlane.xlu0 %902
    %904 = vadd.xlane.f32.xlu0 %v873
    %v905 = vpop.xlane.xlu0 %904
    %906 = vadd.xlane.f32.xlu0 %v875
    %v907 = vpop.xlane.xlu0 %906
    %908 = vadd.xlane.f32.xlu0 %v877
    %v909 = vpop.xlane.xlu0 %908
    %910 = vadd.xlane.f32.xlu0 %v879
    %v911 = vpop.xlane.xlu0 %910
    %912 = vadd.xlane.f32.xlu0 %v881
    %v913 = vpop.xlane.xlu0 %912
    %914 = vadd.xlane.f32.xlu0 %v883
    %v915 = vpop.xlane.xlu0 %914
    %v916 = vrcp.pop %v885
    %v917 = vrcp.pop %v887
    %v918 = vrcp.pop %v889
    %v919 = vrcp.pop %v891
    %v920 = vrcp.pop %v893
    %v921 = vrcp.pop %v895
    %v922 = vrcp.pop %v897
    %v923 = vrcp.pop %v899
    %v924 = vrcp.pop %v901
    %v925 = vrcp.pop %v903
    %v926 = vrcp.pop %v905
    %v927 = vrcp.pop %v907
    %v928 = vrcp.pop %v909
    %v929 = vrcp.pop %v911
    %v930 = vrcp.pop %v913
    %v931 = vrcp.pop %v915
    %v932 = vmul.f32 %v853, %v916
    %v933 = vmul.f32 %v855, %v917
    %v934 = vmul.f32 %v857, %v918
    %v935 = vmul.f32 %v859, %v919
    %v936 = vmul.f32 %v861, %v920
    %v937 = vmul.f32 %v863, %v921
    %v938 = vmul.f32 %v865, %v922
    %v939 = vmul.f32 %v867, %v923
    %v940 = vmul.f32 %v869, %v924
    %v941 = vmul.f32 %v871, %v925
    %v942 = vmul.f32 %v873, %v926
    %v943 = vmul.f32 %v875, %v927
    %v944 = vmul.f32 %v877, %v928
    %v945 = vmul.f32 %v879, %v929
    %v946 = vmul.f32 %v881, %v930
    %v947 = vmul.f32 %v883, %v931
    %948 = vst [vmem:[#allocation5] sm:$0xff] %v932
    %949 = vst [vmem:[#allocation5 + $0x8] sm:$0xff] %v933
    %950 = vst [vmem:[#allocation5 + $0x10] sm:$0xff] %v934
    %951 = vst [vmem:[#allocation5 + $0x18] sm:$0xff] %v935
    %952 = vst [vmem:[#allocation5 + $0x20] sm:$0xff] %v936
    %953 = vst [vmem:[#allocation5 + $0x28] sm:$0xff] %v937
    %954 = vst [vmem:[#allocation5 + $0x30] sm:$0xff] %v938
    %955 = vst [vmem:[#allocation5 + $0x38] sm:$0xff] %v939
    %956 = vst [vmem:[#allocation5 + $0x40] sm:$0xff] %v940
    %957 = vst [vmem:[#allocation5 + $0x48] sm:$0xff] %v941
    %958 = vst [vmem:[#allocation5 + $0x50] sm:$0xff] %v942
    %959 = vst [vmem:[#allocation5 + $0x58] sm:$0xff] %v943
    %960 = vst [vmem:[#allocation5 + $0x60] sm:$0xff] %v944
    %961 = vst [vmem:[#allocation5 + $0x68] sm:$0xff] %v945
    %962 = vst [vmem:[#allocation5 + $0x70] sm:$0xff] %v946
    %963 = vst [vmem:[#allocation5 + $0x78] sm:$0xff] %v947
    // Predicated region
    $region14: #{tpu_custom_call.1} parent=1 // pred_check
      _
    $region15: #{tpu_custom_call.1} parent=1 // pred_check_branch
      %965 = sbr.rel (0) target = $region17
    $region16: #{tpu_custom_call.1} parent=1 // pred_region
      %s967 = ssub.s32 2048, 2048
      %968 = vsyncadd [#allocation4], %s967
      %s969 = sshll.u32 [#allocation5], 4
      %s970 = int_to_ptr.vmem [resolvable:$true] %s969
      %975 = dma.vmem_to_hbm [thread:$0]  %s970, 2048, %s2, [#allocation4], 128, 128, 8
    $region17: #{tpu_custom_call.1} parent=1 // pred_fallthru
      _
    // Predicated region
    $region18: #{tpu_custom_call.1} parent=1 // pred_check
      _
    $region19: #{tpu_custom_call.1} parent=1 // pred_check_branch
      %977 = sbr.rel (0) target = $region21
    $region20: #{tpu_custom_call.1} parent=1 // pred_region
      %978 = dma.done [#allocation4], 2048
    $region21: #{tpu_custom_call.1} parent=1 // pred_fallthru
      _
    %979 = vsyncpa [#allocation3], 1
    %980 = vsyncpa [#allocation4], 1

</llo_original>
